<compile_context>
chip_gen: v5e
topology: v5e:2x2
jax: 0.10.0
libtpu: 0.0.40
codegen_flags: <defaults>
</compile_context>

<pallas_src>
import functools

import jax
import jax.numpy as jnp
from jax import lax
from jax.experimental import pallas as pl
from jax.experimental.pallas import tpu as pltpu

WAITK = 3  # args.waitk default


# ----------------------------------------------------------------------------
# Pallas kernel: fused Linear + GLU + wait-k masked max over Ts.
# ----------------------------------------------------------------------------
def _path_gated_max_kernel(x_ref, wt_ref, b_ref, o_ref, *, waitk):
    # x_ref : (TQ, Ts, Cin)   one (batch, Tt-tile) block, channels-last (C on lanes)
    # wt_ref: (Cin, 2C)       transposed Linear weight
    # b_ref : (1, 2C)         Linear bias
    # o_ref : (TQ, C)
    tq, ts, cin = x_ref.shape
    two_c = wt_ref.shape[1]
    c = two_c // 2

    # ---- Linear on the MXU: (TQ*Ts, Cin) @ (Cin, 2C), f32 accumulation ----
    x2d = x_ref[...].reshape(tq * ts, cin)
    h = jnp.dot(x2d, wt_ref[...], preferred_element_type=jnp.float32)
    h = h + b_ref[...]                                   # broadcast (1, 2C)

    # ---- GLU: a * sigmoid(g)  (sigmoid -> EUP slot) ----
    a = h[:, :c]
    g = h[:, c:]
    glu = (a * jax.nn.sigmoid(g)).reshape(tq, ts, c)     # (TQ, Ts, C)

    # ---- wait-k causal additive bias, computed in-kernel (no HBM mask) ----
    # valid iff s < t_global + waitk   (== torch.triu(neg_inf, waitk) zeroing)
    t0 = pl.program_id(1) * tq
    t_idx = lax.broadcasted_iota(jnp.int32, (tq, ts, 1), 0) + t0
    s_idx = lax.broadcasted_iota(jnp.int32, (tq, ts, 1), 1)
    bias = jnp.where(s_idx < t_idx + waitk,
                     jnp.float32(0.0), -jnp.inf)          # (TQ, Ts, 1) -> lane bcast

    # ---- masked max over the Ts (source) axis ----
    red = jnp.max(glu + bias, axis=1)                    # (TQ, C)
    o_ref[...] = red.astype(o_ref.dtype)


# ----------------------------------------------------------------------------
# Tile-size selection: largest divisor of Tt whose block fits a small VMEM budget
# (keeps double-buffered blocks well under the v7x 64 MiB VMEM), preferring >= 8
# rows so output stores are full (8, 128) tiles.
# ----------------------------------------------------------------------------
def _choose_tq(Tt, Ts, Cin, two_c, itemsize, vmem_budget_bytes=2 * 1024 * 1024):
    per_row_bytes = Ts * max(Cin * itemsize, two_c * 4)  # x row + f32 intermediates
    max_rows = max(1, vmem_budget_bytes // max(per_row_bytes, 1))
    for cand in range(min(Tt, int(max_rows)), 0, -1):
        if Tt % cand == 0:
            return cand
    return 1


# ----------------------------------------------------------------------------
# Wrapper (forward pass of PathGatedMAX).
#   weight: (2C, Cin) in the torch nn.Linear convention; bias: (2C,)
# ----------------------------------------------------------------------------
def path_gated_max_forward(x, weight, bias, waitk=WAITK,
                           need_attention_weights=False, tq=None):
    if need_attention_weights:
        # TODO(synk): attention-histogram branch (unmasked argmax counts over Ts) not ported.
        raise NotImplementedError("need_attention_weights=True path not implemented")

    B, Tt, Ts, Cin = x.shape
    two_c = weight.shape[0]
    C = two_c // 2
    assert weight.shape == (two_c, Cin) and bias.shape == (two_c,)

    wt = weight.T.astype(x.dtype)            # (Cin, 2C)
    b2 = bias.reshape(1, two_c).astype(jnp.float32)

    if tq is None:
        tq = _choose_tq(Tt, Ts, Cin, two_c, jnp.dtype(x.dtype).itemsize)
    assert Tt % tq == 0, "TQ must divide Tt"
    grid = (B, Tt // tq)

    cost = pl.CostEstimate(
        flops=2 * B * Tt * Ts * Cin * two_c + 4 * B * Tt * Ts * C,
        transcendentals=B * Tt * Ts * C,
        bytes_accessed=(x.size * x.dtype.itemsize
                        + wt.size * wt.dtype.itemsize + b2.size * 4
                        + B * Tt * C * x.dtype.itemsize),
    )

    kernel = functools.partial(_path_gated_max_kernel, waitk=waitk)
    out = pl.pallas_call(
        kernel,
        out_shape=jax.ShapeDtypeStruct((B, Tt, C), x.dtype),
        grid=grid,
        in_specs=[
            pl.BlockSpec((None, tq, Ts, Cin), lambda bi, ti: (bi, ti, 0, 0)),
            pl.BlockSpec((Cin, two_c), lambda bi, ti: (0, 0)),
            pl.BlockSpec((1, two_c), lambda bi, ti: (0, 0)),
        ],
        out_specs=pl.BlockSpec((None, tq, C), lambda bi, ti: (bi, ti, 0)),
        compiler_params=pltpu.CompilerParams(
            dimension_semantics=("parallel", "parallel")),
        cost_estimate=cost,
    )(x, wt, b2)
    return (out, None)


# ----------------------------------------------------------------------------
# Pure-JAX reference mirroring the PyTorch ops (Linear + GLU + triu(-inf) + max).
# ----------------------------------------------------------------------------
def _torch_equivalent_ref(x, weight, bias, waitk):
    h = jnp.einsum('btsc,dc->btsd', x, weight,
                   precision=lax.Precision.HIGHEST) + bias
    C = weight.shape[0] // 2
    glu = h[..., :C] * jax.nn.sigmoid(h[..., C:])
    Tt, Ts = x.shape[1], x.shape[2]
    mask = jnp.where(
        jnp.arange(Ts)[None, :] - jnp.arange(Tt)[:, None] >= waitk,
        -jnp.inf, 0.0)
    return jnp.max(glu + mask[None, :, :, None], axis=2)


if __name__ == "__main__":
    key = jax.random.PRNGKey(0)
    k1, k2, k3 = jax.random.split(key, 3)

    # --- Test 1: B=2, Tt=8, Ts=16, C=128 (lane-dense output, single Tt tile) ---
    B, Tt, Ts, C = 2, 8, 16, 128
    x1 = jax.random.normal(k1, (B, Tt, Ts, C), dtype=jnp.float32)
    limit = (6.0 / (C + 2 * C)) ** 0.5            # xavier_uniform for Linear(C, 2C)
    w = jax.random.uniform(k2, (2 * C, C), minval=-limit, maxval=limit,
                           dtype=jnp.float32)
    b = jnp.zeros((2 * C,), dtype=jnp.float32)    # nn.init.constant_(bias, 0.0)

    out1, attn1 = path_gated_max_forward(x1, w, b, waitk=WAITK)
    out1 = jax.block_until_ready(out1)
    ref1 = _torch_equivalent_ref(x1, w, b, WAITK)
    assert out1.shape == (B, Tt, C) and attn1 is None
    assert bool(jnp.all(jnp.isfinite(out1)))
    assert jnp.allclose(out1, ref1, atol=1e-2, rtol=1e-2), "mismatch on test 1"

    # --- Test 2: multi-tile Tt (tq=8 -> grid (2,2)), waitk=1, Ts=8 ---
    B2, Tt2, Ts2 = 2, 16, 8
    x2 = jax.random.normal(k3, (B2, Tt2, Ts2, C), dtype=jnp.float32)
    out2, _ = path_gated_max_forward(x2, w, b, waitk=1, tq=8)
    out2 = jax.block_until_ready(out2)
    ref2 = _torch_equivalent_ref(x2, w, b, 1)
    assert out2.shape == (B2, Tt2, C)
    assert jnp.allclose(out2, ref2, atol=1e-2, rtol=1e-2), "mismatch on test 2"

    print("KERNEL_OK")
</pallas_src>

<mosaic_0001>
module attributes {stable_mosaic.version = 11 : i64} {
  func.func @_path_gated_max_kernel(%arg0: i32, %arg1: i32, %arg2: memref<1x8x16x128xf32, #tpu.memory_space<vmem>>, %arg3: memref<128x256xf32, #tpu.memory_space<vmem>>, %arg4: memref<1x256xf32, #tpu.memory_space<vmem>>, %arg5: memref<1x8x128xf32, #tpu.memory_space<vmem>>) attributes {dimension_semantics = [#tpu.dimension_semantics<parallel>, #tpu.dimension_semantics<parallel>], iteration_bounds = array<i64: 2, 1>, scalar_prefetch = 0 : i64, scratch_operands = 0 : i64, tpu.core_type = #tpu.core_type<tc>, window_params = [{transform_indices = @transform_0, window_bounds = array<i64: 1, 8, 16, 128>}, {pipeline_mode = #tpu.pipeline_mode<synchronous>, transform_indices = @transform_1, window_bounds = array<i64: 128, 256>}, {pipeline_mode = #tpu.pipeline_mode<synchronous>, transform_indices = @transform_2, window_bounds = array<i64: 1, 256>}, {transform_indices = @transform_3, window_bounds = array<i64: 1, 8, 128>}]} {
    %c0 = arith.constant 0 : index
    %c0_0 = arith.constant 0 : index
    %c0_1 = arith.constant 0 : index
    %c0_2 = arith.constant 0 : index
    %0 = vector.load %arg2[%c0, %c0_0, %c0_1, %c0_2] : memref<1x8x16x128xf32, #tpu.memory_space<vmem>>, vector<1x8x16x128xf32>
    %1 = vector.shape_cast %0 : vector<1x8x16x128xf32> to vector<8x16x128xf32>
    %2 = vector.shape_cast %1 : vector<8x16x128xf32> to vector<128x128xf32>
    %c0_3 = arith.constant 0 : index
    %c0_4 = arith.constant 0 : index
    %3 = vector.load %arg3[%c0_3, %c0_4] : memref<128x256xf32, #tpu.memory_space<vmem>>, vector<128x256xf32>
    %cst = arith.constant dense<0.000000e+00> : vector<128x256xf32>
    %4 = tpu.matmul %2, %3, %cst {dimension_numbers = #tpu.dot_dimension_numbers<[1], [0], [0], [1], [0, 0, 1, 1], [], []>} : vector<128x128xf32>, vector<128x256xf32>, vector<128x256xf32> -> vector<128x256xf32>
    %c0_5 = arith.constant 0 : index
    %c0_6 = arith.constant 0 : index
    %5 = vector.load %arg4[%c0_5, %c0_6] : memref<1x256xf32, #tpu.memory_space<vmem>>, vector<1x256xf32>
    %6 = vector.broadcast %5 : vector<1x256xf32> to vector<128x256xf32>
    %7 = arith.addf %4, %6 : vector<128x256xf32>
    %8 = vector.extract_strided_slice %7 {offsets = [0, 0], sizes = [128, 128], strides = [1, 1]} : vector<128x256xf32> to vector<128x128xf32>
    %9 = vector.extract_strided_slice %7 {offsets = [0, 128], sizes = [128, 128], strides = [1, 1]} : vector<128x256xf32> to vector<128x128xf32>
    %10 = arith.negf %9 : vector<128x128xf32>
    %11 = math.exp %10 : vector<128x128xf32>
    %cst_7 = arith.constant 1.000000e+00 : f32
    %12 = vector.broadcast %cst_7 : f32 to vector<128x128xf32>
    %13 = arith.addf %12, %11 : vector<128x128xf32>
    %14 = arith.divf %12, %13 : vector<128x128xf32>
    %15 = arith.mulf %8, %14 : vector<128x128xf32>
    %16 = vector.shape_cast %15 : vector<128x128xf32> to vector<8x16x128xf32>
    %c8_i32 = arith.constant 8 : i32
    %17 = arith.muli %arg1, %c8_i32 : i32
    %18 = tpu.iota {dimensions = array<i32: 0>} : vector<8x16x1xi32>
    %19 = vector.broadcast %17 : i32 to vector<8x16x1xi32>
    %20 = arith.addi %18, %19 : vector<8x16x1xi32>
    %21 = tpu.iota {dimensions = array<i32: 1>} : vector<8x16x1xi32>
    %c3_i32 = arith.constant 3 : i32
    %22 = vector.broadcast %c3_i32 : i32 to vector<8x16x1xi32>
    %23 = arith.addi %20, %22 : vector<8x16x1xi32>
    %24 = arith.cmpi slt, %21, %23 : vector<8x16x1xi32>
    %cst_8 = arith.constant 0.000000e+00 : f32
    %cst_9 = arith.constant 0xFF800000 : f32
    %25 = vector.broadcast %cst_8 : f32 to vector<8x16x1xf32>
    %26 = vector.broadcast %cst_9 : f32 to vector<8x16x1xf32>
    %27 = arith.select %24, %25, %26 : vector<8x16x1xi1>, vector<8x16x1xf32>
    %28 = vector.broadcast %27 : vector<8x16x1xf32> to vector<8x16x128xf32>
    %29 = arith.addf %16, %28 : vector<8x16x128xf32>
    %cst_10 = arith.constant dense<0xFF800000> : vector<8x128xf32>
    %30 = vector.multi_reduction <maximumf>, %29, %cst_10 [1] : vector<8x16x128xf32> to vector<8x128xf32>
    %c0_11 = arith.constant 0 : index
    %c0_12 = arith.constant 0 : index
    %c0_13 = arith.constant 0 : index
    %31 = vector.load %arg5[%c0_11, %c0_12, %c0_13] : memref<1x8x128xf32, #tpu.memory_space<vmem>>, vector<1x8x128xf32>
    %32 = vector.shape_cast %31 : vector<1x8x128xf32> to vector<8x128xf32>
    %33 = vector.shape_cast %30 : vector<8x128xf32> to vector<1x8x128xf32>
    tpu.vector_store %arg5[%c0_11, %c0_12, %c0_13], %33 {strides = array<i32>} : memref<1x8x128xf32, #tpu.memory_space<vmem>>, vector<1x8x128xf32>,
    return
  }
  func.func @transform_0(%arg0: i32, %arg1: i32) -> (i32, i32, i32, i32) {
    %c0_i32 = arith.constant 0 : i32
    %c0_i32_0 = arith.constant 0 : i32
    %c0_i32_1 = arith.constant 0 : i32
    return %arg0, %arg1, %c0_i32, %c0_i32_0 : i32, i32, i32, i32
  }
  func.func @transform_1(%arg0: i32, %arg1: i32) -> (i32, i32) {
    %c0_i32 = arith.constant 0 : i32
    %c0_i32_0 = arith.constant 0 : i32
    %c0_i32_1 = arith.constant 0 : i32
    return %c0_i32, %c0_i32_0 : i32, i32
  }
  func.func @transform_2(%arg0: i32, %arg1: i32) -> (i32, i32) {
    %c0_i32 = arith.constant 0 : i32
    %c0_i32_0 = arith.constant 0 : i32
    %c0_i32_1 = arith.constant 0 : i32
    return %c0_i32, %c0_i32_0 : i32, i32
  }
  func.func @transform_3(%arg0: i32, %arg1: i32) -> (i32, i32, i32) {
    %c0_i32 = arith.constant 0 : i32
    %c0_i32_0 = arith.constant 0 : i32
    return %arg0, %arg1, %c0_i32 : i32, i32, i32
  }
}

</mosaic_0001>

<llo_original>
// kernel: tpu_custom_call.1
$region0: #{tpu_custom_call.1}
  #allocation0 [shape = 'u32[]', space=smem, size = 0x4, offset = 0x4, fixed_abs, tag = 'smem constant byte address 0x4 - core index']
  #allocation1 [shape = 'u32[72,128]{1,0:T(1,128)}', space=vmem, size = 0x9000, scoped, tag = 'internal scratch']
  %s0 = inlined_call_operand.hbm [shape: f32[2,8,16,128], index: 0, kind: input, shape index: {}]
  %s1 = inlined_call_operand.hbm [shape: f32[128,256], index: 1, kind: input, shape index: {}]
  %s2 = inlined_call_operand.hbm [shape: f32[1,256], index: 2, kind: input, shape index: {}]
  %s3 = inlined_call_operand.hbm [shape: f32[2,8,128], index: 3, kind: output, shape index: {}]
  %s4 = sld [smem:[#allocation0]]
  $region57: #{tpu_custom_call.1} parent=0
    _
  %s6 = ssub.s32 1, %s4
  %s7 = scalar_select 0, %s6, %s4
  $region1: #{tpu_custom_call.1} parent=0
    #allocation2 [shape = 'u8[131072]{0}', space=vmem, size = 0x20000, scoped, tag = 'input window, operand 0']
    #allocation3 [shape = 's32[2]{0}', space=sflag, size = 0x8, scoped, tag = 'scoped memory for tpu_custom_call.1']
    #allocation4 [shape = 's32[2]{0}', space=sflag, size = 0x8, scoped, tag = 'scoped memory for tpu_custom_call.1']
    #allocation5 [shape = 'u8[131072]{0}', space=vmem, size = 0x20000, scoped, tag = 'input window, operand 1, single buffered']
    #allocation6 [shape = 's32[1]{0}', space=sflag, size = 0x4, scoped, tag = 'scoped memory for tpu_custom_call.1']
    #allocation7 [shape = 'u8[1024]{0}', space=vmem, size = 0x400, scoped, tag = 'input window, operand 2, single buffered']
    #allocation8 [shape = 'u8[8192]{0}', space=vmem, size = 0x2000, scoped, tag = 'output window, operand 0']
    %8 = vsyncpa [#allocation3], 0
    %s9 = scalar_lea.sflag [#allocation3], 1
    %10 = vsyncpa %s9, 0
    %11 = vsyncpa [#allocation6], 0
    %12 = vsyncpa [#allocation4], 0
    %s13 = scalar_lea.sflag [#allocation4], 1
    %14 = vsyncpa %s13, 0
    loop: start=0, step=1, limit=4
    $region2: #{tpu_custom_call.1} parent=1 // loop_pre_header
      _
    $region3: #{tpu_custom_call.1} parent=1 // loop_header
      %s16 = sphi 0, %s20
      %p17 = scmp.ge.s32.totalorder %s16, 4
      %s23 = sphi 0, %s35
      %s24 = sphi 0, %s31
      %s25 = sphi 0, %s23
      %s26 = sphi 0, %s24
      %s27 = sphi 0, %s25
      %s28 = sphi 0, %s26
      %s40 = sphi 0, %s42
      %s43 = sphi 0, %s40
      %s44 = sphi 0, %s43
      %s60 = sphi 0, %s44
      %s64 = sphi 0, %s64
      %s66 = sphi 0, %s64
      %s67 = sphi 0, %s66
      %s81 = sphi 0, %s67
      %s85 = sphi 0, %s85
      %s87 = sphi 0, %s85
      %s88 = sphi 0, %s87
      %s102 = sphi 0, %s88
      %s110 = sphi 0, %s112
      %s113 = sphi 0, %s110
      %s114 = sphi 0, %s113
      %s130 = sphi 0, %s114
    $region4: #{tpu_custom_call.1} parent=1 // loop_header_branch
      %19 = sbr.rel (%p17) target = $region8
    $region5: #{tpu_custom_call.1} parent=1 // loop_body
      %s21 = ssub.s32 %s16, 1
      %s22 = ssub.s32 %s16, 2
      %s29 = sadd.s32 1, %s24
      %p30 = scmp.ge.s32.totalorder %s29, 1
      %s31 = scalar_select %p30, 0, %s29
      %s32 = sadd.s32 1, %s23
      %s33 = scalar_select %p30, %s32, %s23
      %p34 = scmp.ge.s32.totalorder %s33, 2
      %s35 = scalar_select %p34, 0, %s33
      %s36 = ssub.s32 %s23, %s35
      %s37 = ssub.s32 %s24, %s31
      %s38 = sor.u32 %s36, %s37
      %p39 = scmp.eq.s32.totalorder %s38, 0
      %s41 = sadd.s32 %s40, 1
      %s42 = scalar_select %p39, %s40, %s41
      %p45 = pneg %p39
      %p46 = scmp.eq.s32.totalorder %s16, 1
      %p47 = por %p45, %p46
      %p48 = scmp.ne.s32.totalorder %s40, %s43
      %p49 = scmp.eq.s32.totalorder %s16, 0
      %p50 = por %p48, %p49
      %p51 = scmp.ne.s32.totalorder %s40, %s43
      %p52 = scmp.eq.s32.totalorder %s21, 1
      %p53 = por %p51, %p52
      %p54 = scmp.ne.s32.totalorder %s43, %s44
      %p55 = scmp.eq.s32.totalorder %s21, 0
      %p56 = por %p54, %p55
      %p57 = scmp.ne.s32.totalorder %s43, %s44
      %p58 = scmp.eq.s32.totalorder %s22, 1
      %p59 = por %p57, %p58
      %p61 = scmp.ne.s32.totalorder %s44, %s60
      %p62 = scmp.eq.s32.totalorder %s22, 0
      %p63 = por %p61, %p62
      %s65 = sadd.s32 %s64, 1
      %p68 = scmp.eq.s32.totalorder %s16, 1
      %p69 = scmp.ne.s32.totalorder %s64, %s66
      %p70 = scmp.eq.s32.totalorder %s16, 0
      %p71 = por %p69, %p70
      %p72 = scmp.ne.s32.totalorder %s64, %s66
      %p73 = scmp.eq.s32.totalorder %s21, 1
      %p74 = por %p72, %p73
      %p75 = scmp.ne.s32.totalorder %s66, %s67
      %p76 = scmp.eq.s32.totalorder %s21, 0
      %p77 = por %p75, %p76
      %p78 = scmp.ne.s32.totalorder %s66, %s67
      %p79 = scmp.eq.s32.totalorder %s22, 1
      %p80 = por %p78, %p79
      %p82 = scmp.ne.s32.totalorder %s67, %s81
      %p83 = scmp.eq.s32.totalorder %s22, 0
      %p84 = por %p82, %p83
      %s86 = sadd.s32 %s85, 1
      %p89 = scmp.eq.s32.totalorder %s16, 1
      %p90 = scmp.ne.s32.totalorder %s85, %s87
      %p91 = scmp.eq.s32.totalorder %s16, 0
      %p92 = por %p90, %p91
      %p93 = scmp.ne.s32.totalorder %s85, %s87
      %p94 = scmp.eq.s32.totalorder %s21, 1
      %p95 = por %p93, %p94
      %p96 = scmp.ne.s32.totalorder %s87, %s88
      %p97 = scmp.eq.s32.totalorder %s21, 0
      %p98 = por %p96, %p97
      %p99 = scmp.ne.s32.totalorder %s87, %s88
      %p100 = scmp.eq.s32.totalorder %s22, 1
      %p101 = por %p99, %p100
      %p103 = scmp.ne.s32.totalorder %s88, %s102
      %p104 = scmp.eq.s32.totalorder %s22, 0
      %p105 = por %p103, %p104
      %s106 = ssub.s32 %s23, %s35
      %s107 = ssub.s32 %s24, %s31
      %s108 = sor.u32 %s106, %s107
      %p109 = scmp.eq.s32.totalorder %s108, 0
      %s111 = sadd.s32 %s110, 1
      %s112 = scalar_select %p109, %s110, %s111
      %p115 = pneg %p109
      %p116 = scmp.eq.s32.totalorder %s16, 1
      %p117 = por %p115, %p116
      %p118 = scmp.ne.s32.totalorder %s110, %s113
      %p119 = scmp.eq.s32.totalorder %s16, 0
      %p120 = por %p118, %p119
      %p121 = scmp.ne.s32.totalorder %s110, %s113
      %p122 = scmp.eq.s32.totalorder %s21, 1
      %p123 = por %p121, %p122
      %p124 = scmp.ne.s32.totalorder %s113, %s114
      %p125 = scmp.eq.s32.totalorder %s21, 0
      %p126 = por %p124, %p125
      %p127 = scmp.ne.s32.totalorder %s113, %s114
      %p128 = scmp.eq.s32.totalorder %s22, 1
      %p129 = por %p127, %p128
      %p131 = scmp.ne.s32.totalorder %s114, %s130
      %p132 = scmp.eq.s32.totalorder %s22, 0
      %p133 = por %p131, %p132
      %p134 = scmp.le.s32.totalorder 1, %s16
      %p135 = scmp.lt.s32.totalorder %s16, 3
      %p136 = pnand %p134, %p135
      %p137 = pneg %p136
      // Predicated region
      $region9: #{tpu_custom_call.1} parent=5 // pred_check
        _
      $region10: #{tpu_custom_call.1} parent=5 // pred_check_branch
        %139 = sbr.rel (%p136) target = $region12
      $region11: #{tpu_custom_call.1} parent=5 // pred_region
        %s140 = ssub.s32 %s16, 1
        // Predicated region
        $region13: #{tpu_custom_call.1} parent=11 // pred_check
          %p141 = pneg %p77
        $region14: #{tpu_custom_call.1} parent=11 // pred_check_branch
          %143 = sbr.rel (%p141) target = $region16
        $region15: #{tpu_custom_call.1} parent=11 // pred_region
          %145 = vsyncadd [#allocation6], 0
          %s146 = sshll.u32 %s1, 4
          %s147 = int_to_ptr.hbm [resolvable:$true] %s146
          %s148 = sshll.u32 [#allocation5], 4
          %s149 = int_to_ptr.vmem [resolvable:$true] %s148
          %154 = dma.hbm_to_vmem [thread:$0]  %s147, 4096, %s149, [#allocation6], 256, 256, 16
        $region16: #{tpu_custom_call.1} parent=11 // pred_fallthru
          _
        // Predicated region
        $region17: #{tpu_custom_call.1} parent=11 // pred_check
          %p155 = pneg %p98
        $region18: #{tpu_custom_call.1} parent=11 // pred_check_branch
          %157 = sbr.rel (%p155) target = $region20
        $region19: #{tpu_custom_call.1} parent=11 // pred_region
          %159 = vsyncadd [#allocation6], 0
          %s161 = sshll.u32 %s2, 4
          %s162 = int_to_ptr.hbm [resolvable:$true] %s161
          %s163 = sshll.u32 [#allocation7], 4
          %s164 = int_to_ptr.vmem [resolvable:$true] %s163
          %166 = dma.hbm_to_vmem [thread:$0]  %s162, 32, %s164, [#allocation6]
        $region20: #{tpu_custom_call.1} parent=11 // pred_fallthru
          _
      $region12: #{tpu_custom_call.1} parent=5 // pred_fallthru
        _
      %p167 = scmp.lt.s32.totalorder %s16, 2
      // Predicated region
      $region21: #{tpu_custom_call.1} parent=5 // pred_check
        %p168 = pneg %p167
      $region22: #{tpu_custom_call.1} parent=5 // pred_check_branch
        %170 = sbr.rel (%p168) target = $region24
      $region23: #{tpu_custom_call.1} parent=5 // pred_region
        // Predicated region
        $region25: #{tpu_custom_call.1} parent=23 // pred_check
          %p171 = pneg %p50
        $region26: #{tpu_custom_call.1} parent=23 // pred_check_branch
          %173 = sbr.rel (%p171) target = $region28
        $region27: #{tpu_custom_call.1} parent=23 // pred_region
          %s174 = sand.u32 %s40, 1
          %s175 = scalar_lea.sflag [#allocation3], %s174
          %s176 = sand.u32 %s40, 1
          %s177 = smul.addr %s176, 128
          %s178 = scalar_lea.vmem [#allocation2], %s177
          %s179 = smul.u32 8, %s24
          %181 = vsyncadd %s175, 0
          %s182 = smul.addr %s179, 2
          %s183 = smul.addr %s23, 16
          %s184 = sadd.s32 %s182, %s183
          %s185 = smul.addr %s184, 8
          %s186 = scalar_lea.hbm %s0, %s185
          %s187 = sshll.u32 %s186, 4
          %s188 = int_to_ptr.hbm [resolvable:$true] %s187
          %s189 = sshll.u32 %s178, 4
          %s190 = int_to_ptr.vmem [resolvable:$true] %s189
          %195 = dma.hbm_to_vmem [thread:$0]  %s188, 2048, %s190, %s175, 128, 128, 8
        $region28: #{tpu_custom_call.1} parent=23 // pred_fallthru
          _
      $region24: #{tpu_custom_call.1} parent=5 // pred_fallthru
        _
      %p196 = scmp.le.s32.totalorder 1, %s16
      %p197 = scmp.lt.s32.totalorder %s16, 3
      %p198 = pnand %p196, %p197
      %p199 = pneg %p198
      // Predicated region
      $region29: #{tpu_custom_call.1} parent=5 // pred_check
        _
      $region30: #{tpu_custom_call.1} parent=5 // pred_check_branch
        %201 = sbr.rel (%p198) target = $region32
      $region31: #{tpu_custom_call.1} parent=5 // pred_region
        %s202 = ssub.s32 %s16, 1
        %s203 = sand.u32 %s43, 1
        %s204 = scalar_lea.sflag [#allocation3], %s203
        %s205 = sand.u32 %s43, 1
        %s206 = smul.addr %s205, 128
        %s207 = scalar_lea.vmem [#allocation2], %s206
        // Predicated region
        $region33: #{tpu_custom_call.1} parent=31 // pred_check
          %p208 = pneg %p56
        $region34: #{tpu_custom_call.1} parent=31 // pred_check_branch
          %210 = sbr.rel (%p208) target = $region36
        $region35: #{tpu_custom_call.1} parent=31 // pred_region
          %212 = dma.done %s204, 2048
        $region36: #{tpu_custom_call.1} parent=31 // pred_fallthru
          _
        // Predicated region
        $region37: #{tpu_custom_call.1} parent=31 // pred_check
          %p213 = pneg %p77
        $region38: #{tpu_custom_call.1} parent=31 // pred_check_branch
          %215 = sbr.rel (%p213) target = $region40
        $region39: #{tpu_custom_call.1} parent=31 // pred_region
          %217 = dma.done [#allocation6], 4096
        $region40: #{tpu_custom_call.1} parent=31 // pred_fallthru
          _
        // Predicated region
        $region41: #{tpu_custom_call.1} parent=31 // pred_check
          %p218 = pneg %p98
        $region42: #{tpu_custom_call.1} parent=31 // pred_check_branch
          %220 = sbr.rel (%p218) target = $region44
        $region43: #{tpu_custom_call.1} parent=31 // pred_region
          %222 = dma.done [#allocation6], 32
        $region44: #{tpu_custom_call.1} parent=31 // pred_fallthru
          _
        %s223 = sand.u32 %s43, 1
        %s224 = scalar_lea.sflag [#allocation3], %s223
        %s225 = sand.u32 %s43, 1
        %s226 = smul.addr %s225, 128
        %s227 = scalar_lea.vmem [#allocation2], %s226
        %p228 = pneg %p56
        %p229 = pneg %p53
        %p230 = pneg %p77
        %p231 = pneg %p74
        %p232 = pneg %p98
        %p233 = pneg %p95
        %p234 = pneg %p126
        %p235 = pneg %p123
        %s236 = sand.u32 %s113, 1
        %s237 = scalar_lea.sflag [#allocation4], %s236
        %s238 = sand.u32 %s113, 1
        %s239 = smul.addr %s238, 8
        %s240 = scalar_lea.vmem [#allocation8], %s239
        %s241 = smul.u32 8, %s26
        %v242 = vld [vmem:[%s207] sm:$0xff]
        %v243 = vld [vmem:[%s207 + $0x8] sm:$0xff]
        %v244 = vld [vmem:[%s207 + $0x10] sm:$0xff]
        %v245 = vld [vmem:[%s207 + $0x18] sm:$0xff]
        %v246 = vld [vmem:[%s207 + $0x20] sm:$0xff]
        %v247 = vld [vmem:[%s207 + $0x28] sm:$0xff]
        %v248 = vld [vmem:[%s207 + $0x30] sm:$0xff]
        %v249 = vld [vmem:[%s207 + $0x38] sm:$0xff]
        %v250 = vld [vmem:[%s207 + $0x40] sm:$0xff]
        %v251 = vld [vmem:[%s207 + $0x48] sm:$0xff]
        %v252 = vld [vmem:[%s207 + $0x50] sm:$0xff]
        %v253 = vld [vmem:[%s207 + $0x58] sm:$0xff]
        %v254 = vld [vmem:[%s207 + $0x60] sm:$0xff]
        %v255 = vld [vmem:[%s207 + $0x68] sm:$0xff]
        %v256 = vld [vmem:[%s207 + $0x70] sm:$0xff]
        %v257 = vld [vmem:[%s207 + $0x78] sm:$0xff]
        %v258 = vld [vmem:[#allocation5] sm:$0xff]
        %v259 = vld [vmem:[#allocation5 + $0x8] sm:$0xff]
        %v260 = vld [vmem:[#allocation5 + $0x10] sm:$0xff]
        %v261 = vld [vmem:[#allocation5 + $0x18] sm:$0xff]
        %v262 = vld [vmem:[#allocation5 + $0x20] sm:$0xff]
        %v263 = vld [vmem:[#allocation5 + $0x28] sm:$0xff]
        %v264 = vld [vmem:[#allocation5 + $0x30] sm:$0xff]
        %v265 = vld [vmem:[#allocation5 + $0x38] sm:$0xff]
        %v266 = vld [vmem:[#allocation5 + $0x40] sm:$0xff]
        %v267 = vld [vmem:[#allocation5 + $0x48] sm:$0xff]
        %v268 = vld [vmem:[#allocation5 + $0x50] sm:$0xff]
        %v269 = vld [vmem:[#allocation5 + $0x58] sm:$0xff]
        %v270 = vld [vmem:[#allocation5 + $0x60] sm:$0xff]
        %v271 = vld [vmem:[#allocation5 + $0x68] sm:$0xff]
        %v272 = vld [vmem:[#allocation5 + $0x70] sm:$0xff]
        %v273 = vld [vmem:[#allocation5 + $0x78] sm:$0xff]
        %v274 = vld [vmem:[#allocation5 + $0x80] sm:$0xff]
        %v275 = vld [vmem:[#allocation5 + $0x88] sm:$0xff]
        %v276 = vld [vmem:[#allocation5 + $0x90] sm:$0xff]
        %v277 = vld [vmem:[#allocation5 + $0x98] sm:$0xff]
        %v278 = vld [vmem:[#allocation5 + $0xa0] sm:$0xff]
        %v279 = vld [vmem:[#allocation5 + $0xa8] sm:$0xff]
        %v280 = vld [vmem:[#allocation5 + $0xb0] sm:$0xff]
        %v281 = vld [vmem:[#allocation5 + $0xb8] sm:$0xff]
        %v282 = vld [vmem:[#allocation5 + $0xc0] sm:$0xff]
        %v283 = vld [vmem:[#allocation5 + $0xc8] sm:$0xff]
        %v284 = vld [vmem:[#allocation5 + $0xd0] sm:$0xff]
        %v285 = vld [vmem:[#allocation5 + $0xd8] sm:$0xff]
        %v286 = vld [vmem:[#allocation5 + $0xe0] sm:$0xff]
        %v287 = vld [vmem:[#allocation5 + $0xe8] sm:$0xff]
        %v288 = vld [vmem:[#allocation5 + $0xf0] sm:$0xff]
        %v289 = vld [vmem:[#allocation5 + $0xf8] sm:$0xff]
        %v290 = vld [vmem:[#allocation7] sm:$0x3]
        %v292 = vperm.slane %v290, 0
        %v293 = vperm.slane %v290, 1
        %296 = vmatpush.msra.mxu0 %v288
        %297 = vmatpush.msra.mxu0 %v286
        %298 = vmatpush.msra.mxu0 %v284
        %299 = vmatpush.msra.mxu0 %v282
        %300 = vmatpush.msra.mxu0 %v280
        %301 = vmatpush.msra.mxu0 %v278
        %302 = vmatpush.msra.mxu0 %v276
        %303 = vmatpush.msra.mxu0 %v274
        %304 = vmatpush.msra.mxu0 %v272
        %305 = vmatpush.msra.mxu0 %v270
        %306 = vmatpush.msra.mxu0 %v268
        %307 = vmatpush.msra.mxu0 %v266
        %308 = vmatpush.msra.mxu0 %v264
        %309 = vmatpush.msra.mxu0 %v262
        %310 = vmatpush.msra.mxu0 %v260
        %311 = vmatpush.msra.mxu0 %v258
        %312 = vmatmul.f32.gmra.mxu0 %v242
        %v313 = vpop.f32.mrf.mxu0
        %v314 = vadd.f32 %v292, %v313
        %315 = vmatmul.f32.gmra.mxu0 %v243
        %v316 = vpop.f32.mrf.mxu0
        %v317 = vadd.f32 %v292, %v316
        %318 = vmatmul.f32.gmra.mxu0 %v244
        %v319 = vpop.f32.mrf.mxu0
        %v320 = vadd.f32 %v292, %v319
        %321 = vmatmul.f32.gmra.mxu0 %v245
        %v322 = vpop.f32.mrf.mxu0
        %v323 = vadd.f32 %v292, %v322
        %324 = vmatmul.f32.gmra.mxu0 %v246
        %v325 = vpop.f32.mrf.mxu0
        %v326 = vadd.f32 %v292, %v325
        %327 = vmatmul.f32.gmra.mxu0 %v247
        %v328 = vpop.f32.mrf.mxu0
        %v329 = vadd.f32 %v292, %v328
        %330 = vmatmul.f32.gmra.mxu0 %v248
        %v331 = vpop.f32.mrf.mxu0
        %v332 = vadd.f32 %v292, %v331
        %333 = vmatmul.f32.gmra.mxu0 %v249
        %v334 = vpop.f32.mrf.mxu0
        %v335 = vadd.f32 %v292, %v334
        %336 = vmatmul.f32.gmra.mxu0 %v250
        %v337 = vpop.f32.mrf.mxu0
        %v338 = vadd.f32 %v292, %v337
        %339 = vmatmul.f32.gmra.mxu0 %v251
        %v340 = vpop.f32.mrf.mxu0
        %v341 = vadd.f32 %v292, %v340
        %342 = vmatmul.f32.gmra.mxu0 %v252
        %v343 = vpop.f32.mrf.mxu0
        %v344 = vadd.f32 %v292, %v343
        %345 = vmatmul.f32.gmra.mxu0 %v253
        %v346 = vpop.f32.mrf.mxu0
        %v347 = vadd.f32 %v292, %v346
        %348 = vmatmul.f32.gmra.mxu0 %v254
        %v349 = vpop.f32.mrf.mxu0
        %v350 = vadd.f32 %v292, %v349
        %351 = vmatmul.f32.gmra.mxu0 %v255
        %v352 = vpop.f32.mrf.mxu0
        %v353 = vadd.f32 %v292, %v352
        %354 = vmatmul.f32.gmra.mxu0 %v256
        %v355 = vpop.f32.mrf.mxu0
        %v356 = vadd.f32 %v292, %v355
        %357 = vmatmul.f32.gmra.mxu0 %v257
        %v358 = vpop.f32.mrf.mxu0
        %v359 = vadd.f32 %v292, %v358
        %360 = vdwg.mxu0
        %361 = vmatpush.msra.mxu0 %v289
        %362 = vmatpush.msra.mxu0 %v287
        %363 = vmatpush.msra.mxu0 %v285
        %364 = vmatpush.msra.mxu0 %v283
        %365 = vmatpush.msra.mxu0 %v281
        %366 = vmatpush.msra.mxu0 %v279
        %367 = vmatpush.msra.mxu0 %v277
        %368 = vmatpush.msra.mxu0 %v275
        %369 = vmatpush.msra.mxu0 %v273
        %370 = vmatpush.msra.mxu0 %v271
        %371 = vmatpush.msra.mxu0 %v269
        %372 = vmatpush.msra.mxu0 %v267
        %373 = vmatpush.msra.mxu0 %v265
        %374 = vmatpush.msra.mxu0 %v263
        %375 = vmatpush.msra.mxu0 %v261
        %376 = vmatpush.msra.mxu0 %v259
        %377 = vmatmul.f32.gmra.mxu0 %v242
        %v378 = vpop.f32.mrf.mxu0
        %v379 = vadd.f32 %v293, %v378
        %380 = vmatmul.f32.gmra.mxu0 %v243
        %v381 = vpop.f32.mrf.mxu0
        %v382 = vadd.f32 %v293, %v381
        %383 = vmatmul.f32.gmra.mxu0 %v244
        %v384 = vpop.f32.mrf.mxu0
        %v385 = vadd.f32 %v293, %v384
        %386 = vmatmul.f32.gmra.mxu0 %v245
        %v387 = vpop.f32.mrf.mxu0
        %v388 = vadd.f32 %v293, %v387
        %389 = vmatmul.f32.gmra.mxu0 %v246
        %v390 = vpop.f32.mrf.mxu0
        %v391 = vadd.f32 %v293, %v390
        %392 = vmatmul.f32.gmra.mxu0 %v247
        %v393 = vpop.f32.mrf.mxu0
        %v394 = vadd.f32 %v293, %v393
        %395 = vmatmul.f32.gmra.mxu0 %v248
        %v396 = vpop.f32.mrf.mxu0
        %v397 = vadd.f32 %v293, %v396
        %398 = vmatmul.f32.gmra.mxu0 %v249
        %v399 = vpop.f32.mrf.mxu0
        %v400 = vadd.f32 %v293, %v399
        %401 = vmatmul.f32.gmra.mxu0 %v250
        %v402 = vpop.f32.mrf.mxu0
        %v403 = vadd.f32 %v293, %v402
        %404 = vmatmul.f32.gmra.mxu0 %v251
        %v405 = vpop.f32.mrf.mxu0
        %v406 = vadd.f32 %v293, %v405
        %407 = vmatmul.f32.gmra.mxu0 %v252
        %v408 = vpop.f32.mrf.mxu0
        %v409 = vadd.f32 %v293, %v408
        %410 = vmatmul.f32.gmra.mxu0 %v253
        %v411 = vpop.f32.mrf.mxu0
        %v412 = vadd.f32 %v293, %v411
        %413 = vmatmul.f32.gmra.mxu0 %v254
        %v414 = vpop.f32.mrf.mxu0
        %v415 = vadd.f32 %v293, %v414
        %416 = vmatmul.f32.gmra.mxu0 %v255
        %v417 = vpop.f32.mrf.mxu0
        %v418 = vadd.f32 %v293, %v417
        %419 = vmatmul.f32.gmra.mxu0 %v256
        %v420 = vpop.f32.mrf.mxu0
        %v421 = vadd.f32 %v293, %v420
        %422 = vmatmul.f32.gmra.mxu0 %v257
        %v423 = vpop.f32.mrf.mxu0
        %v424 = vadd.f32 %v293, %v423
        %425 = vdwg.mxu0
        %v426 = vxor.u32 %v379, 2147483648
        %v427 = vxor.u32 %v382, 2147483648
        %v428 = vxor.u32 %v385, 2147483648
        %v429 = vxor.u32 %v388, 2147483648
        %v430 = vxor.u32 %v391, 2147483648
        %v431 = vxor.u32 %v394, 2147483648
        %v432 = vxor.u32 %v397, 2147483648
        %v433 = vxor.u32 %v400, 2147483648
        %v434 = vxor.u32 %v403, 2147483648
        %v435 = vxor.u32 %v406, 2147483648
        %v436 = vxor.u32 %v409, 2147483648
        %v437 = vxor.u32 %v412, 2147483648
        %v438 = vxor.u32 %v415, 2147483648
        %v439 = vxor.u32 %v418, 2147483648
        %v440 = vxor.u32 %v421, 2147483648
        %v441 = vxor.u32 %v424, 2147483648
        %v442 = vmul.f32 %v426, 1.442695
        %v443 = vpow.pop %v442
        %v444 = vmul.f32 %v427, 1.442695
        %v445 = vpow.pop %v444
        %v446 = vmul.f32 %v428, 1.442695
        %v447 = vpow.pop %v446
        %v448 = vmul.f32 %v429, 1.442695
        %v449 = vpow.pop %v448
        %v450 = vmul.f32 %v430, 1.442695
        %v451 = vpow.pop %v450
        %v452 = vmul.f32 %v431, 1.442695
        %v453 = vpow.pop %v452
        %v454 = vmul.f32 %v432, 1.442695
        %v455 = vpow.pop %v454
        %v456 = vmul.f32 %v433, 1.442695
        %v457 = vpow.pop %v456
        %v458 = vmul.f32 %v434, 1.442695
        %v459 = vpow.pop %v458
        %v460 = vmul.f32 %v435, 1.442695
        %v461 = vpow.pop %v460
        %v462 = vmul.f32 %v436, 1.442695
        %v463 = vpow.pop %v462
        %v464 = vmul.f32 %v437, 1.442695
        %v465 = vpow.pop %v464
        %v466 = vmul.f32 %v438, 1.442695
        %v467 = vpow.pop %v466
        %v468 = vmul.f32 %v439, 1.442695
        %v469 = vpow.pop %v468
        %v470 = vmul.f32 %v440, 1.442695
        %v471 = vpow.pop %v470
        %v472 = vmul.f32 %v441, 1.442695
        %v473 = vpow.pop %v472
        %v474 = vadd.f32 %v443, 1.0
        %v475 = vadd.f32 %v445, 1.0
        %v476 = vadd.f32 %v447, 1.0
        %v477 = vadd.f32 %v449, 1.0
        %v478 = vadd.f32 %v451, 1.0
        %v479 = vadd.f32 %v453, 1.0
        %v480 = vadd.f32 %v455, 1.0
        %v481 = vadd.f32 %v457, 1.0
        %v482 = vadd.f32 %v459, 1.0
        %v483 = vadd.f32 %v461, 1.0
        %v484 = vadd.f32 %v463, 1.0
        %v485 = vadd.f32 %v465, 1.0
        %v486 = vadd.f32 %v467, 1.0
        %v487 = vadd.f32 %v469, 1.0
        %v488 = vadd.f32 %v471, 1.0
        %v489 = vadd.f32 %v473, 1.0
        %v490 = vrcp.pop %v474
        %v491 = vmul.f32 %v474, %v490
        %v492 = vsub.f32 1.0, %v491
        %v493 = vmul.f32 %v490, %v492
        %v494 = vadd.f32 %v490, %v493
        %vm495 = vweird.f32 %v474
        %vm496 = vweird.f32 %v490
        %vm497 = vmor %vm495, %vm496
        %v498 = vsel %vm497, %v490, %v494
        %v499 = vand.u32 2147483647, %v474
        %vm500 = vcmp.eq.f32.partialorder %v499, 8.507059e+37
        %v501 = vand.u32 %v474, 2147483648
        %v502 = vor.u32 1.1754944e-38, %v501
        %v503 = vsel %vm500, %v502, %v498
        %v504 = vmul.f32 1.0, %v503
        %v505 = vrcp.pop %v475
        %v506 = vmul.f32 %v475, %v505
        %v507 = vsub.f32 1.0, %v506
        %v508 = vmul.f32 %v505, %v507
        %v509 = vadd.f32 %v505, %v508
        %vm510 = vweird.f32 %v475
        %vm511 = vweird.f32 %v505
        %vm512 = vmor %vm510, %vm511
        %v513 = vsel %vm512, %v505, %v509
        %v514 = vand.u32 2147483647, %v475
        %vm515 = vcmp.eq.f32.partialorder %v514, 8.507059e+37
        %v516 = vand.u32 %v475, 2147483648
        %v517 = vor.u32 1.1754944e-38, %v516
        %v518 = vsel %vm515, %v517, %v513
        %v519 = vmul.f32 1.0, %v518
        %v520 = vrcp.pop %v476
        %v521 = vmul.f32 %v476, %v520
        %v522 = vsub.f32 1.0, %v521
        %v523 = vmul.f32 %v520, %v522
        %v524 = vadd.f32 %v520, %v523
        %vm525 = vweird.f32 %v476
        %vm526 = vweird.f32 %v520
        %vm527 = vmor %vm525, %vm526
        %v528 = vsel %vm527, %v520, %v524
        %v529 = vand.u32 2147483647, %v476
        %vm530 = vcmp.eq.f32.partialorder %v529, 8.507059e+37
        %v531 = vand.u32 %v476, 2147483648
        %v532 = vor.u32 1.1754944e-38, %v531
        %v533 = vsel %vm530, %v532, %v528
        %v534 = vmul.f32 1.0, %v533
        %v535 = vrcp.pop %v477
        %v536 = vmul.f32 %v477, %v535
        %v537 = vsub.f32 1.0, %v536
        %v538 = vmul.f32 %v535, %v537
        %v539 = vadd.f32 %v535, %v538
        %vm540 = vweird.f32 %v477
        %vm541 = vweird.f32 %v535
        %vm542 = vmor %vm540, %vm541
        %v543 = vsel %vm542, %v535, %v539
        %v544 = vand.u32 2147483647, %v477
        %vm545 = vcmp.eq.f32.partialorder %v544, 8.507059e+37
        %v546 = vand.u32 %v477, 2147483648
        %v547 = vor.u32 1.1754944e-38, %v546
        %v548 = vsel %vm545, %v547, %v543
        %v549 = vmul.f32 1.0, %v548
        %v550 = vrcp.pop %v478
        %v551 = vmul.f32 %v478, %v550
        %v552 = vsub.f32 1.0, %v551
        %v553 = vmul.f32 %v550, %v552
        %v554 = vadd.f32 %v550, %v553
        %vm555 = vweird.f32 %v478
        %vm556 = vweird.f32 %v550
        %vm557 = vmor %vm555, %vm556
        %v558 = vsel %vm557, %v550, %v554
        %v559 = vand.u32 2147483647, %v478
        %vm560 = vcmp.eq.f32.partialorder %v559, 8.507059e+37
        %v561 = vand.u32 %v478, 2147483648
        %v562 = vor.u32 1.1754944e-38, %v561
        %v563 = vsel %vm560, %v562, %v558
        %v564 = vmul.f32 1.0, %v563
        %v565 = vrcp.pop %v479
        %v566 = vmul.f32 %v479, %v565
        %v567 = vsub.f32 1.0, %v566
        %v568 = vmul.f32 %v565, %v567
        %v569 = vadd.f32 %v565, %v568
        %vm570 = vweird.f32 %v479
        %vm571 = vweird.f32 %v565
        %vm572 = vmor %vm570, %vm571
        %v573 = vsel %vm572, %v565, %v569
        %v574 = vand.u32 2147483647, %v479
        %vm575 = vcmp.eq.f32.partialorder %v574, 8.507059e+37
        %v576 = vand.u32 %v479, 2147483648
        %v577 = vor.u32 1.1754944e-38, %v576
        %v578 = vsel %vm575, %v577, %v573
        %v579 = vmul.f32 1.0, %v578
        %v580 = vrcp.pop %v480
        %v581 = vmul.f32 %v480, %v580
        %v582 = vsub.f32 1.0, %v581
        %v583 = vmul.f32 %v580, %v582
        %v584 = vadd.f32 %v580, %v583
        %vm585 = vweird.f32 %v480
        %vm586 = vweird.f32 %v580
        %vm587 = vmor %vm585, %vm586
        %v588 = vsel %vm587, %v580, %v584
        %v589 = vand.u32 2147483647, %v480
        %vm590 = vcmp.eq.f32.partialorder %v589, 8.507059e+37
        %v591 = vand.u32 %v480, 2147483648
        %v592 = vor.u32 1.1754944e-38, %v591
        %v593 = vsel %vm590, %v592, %v588
        %v594 = vmul.f32 1.0, %v593
        %v595 = vrcp.pop %v481
        %v596 = vmul.f32 %v481, %v595
        %v597 = vsub.f32 1.0, %v596
        %v598 = vmul.f32 %v595, %v597
        %v599 = vadd.f32 %v595, %v598
        %vm600 = vweird.f32 %v481
        %vm601 = vweird.f32 %v595
        %vm602 = vmor %vm600, %vm601
        %v603 = vsel %vm602, %v595, %v599
        %v604 = vand.u32 2147483647, %v481
        %vm605 = vcmp.eq.f32.partialorder %v604, 8.507059e+37
        %v606 = vand.u32 %v481, 2147483648
        %v607 = vor.u32 1.1754944e-38, %v606
        %v608 = vsel %vm605, %v607, %v603
        %v609 = vmul.f32 1.0, %v608
        %v610 = vrcp.pop %v482
        %v611 = vmul.f32 %v482, %v610
        %v612 = vsub.f32 1.0, %v611
        %v613 = vmul.f32 %v610, %v612
        %v614 = vadd.f32 %v610, %v613
        %vm615 = vweird.f32 %v482
        %vm616 = vweird.f32 %v610
        %vm617 = vmor %vm615, %vm616
        %v618 = vsel %vm617, %v610, %v614
        %v619 = vand.u32 2147483647, %v482
        %vm620 = vcmp.eq.f32.partialorder %v619, 8.507059e+37
        %v621 = vand.u32 %v482, 2147483648
        %v622 = vor.u32 1.1754944e-38, %v621
        %v623 = vsel %vm620, %v622, %v618
        %v624 = vmul.f32 1.0, %v623
        %v625 = vrcp.pop %v483
        %v626 = vmul.f32 %v483, %v625
        %v627 = vsub.f32 1.0, %v626
        %v628 = vmul.f32 %v625, %v627
        %v629 = vadd.f32 %v625, %v628
        %vm630 = vweird.f32 %v483
        %vm631 = vweird.f32 %v625
        %vm632 = vmor %vm630, %vm631
        %v633 = vsel %vm632, %v625, %v629
        %v634 = vand.u32 2147483647, %v483
        %vm635 = vcmp.eq.f32.partialorder %v634, 8.507059e+37
        %v636 = vand.u32 %v483, 2147483648
        %v637 = vor.u32 1.1754944e-38, %v636
        %v638 = vsel %vm635, %v637, %v633
        %v639 = vmul.f32 1.0, %v638
        %v640 = vrcp.pop %v484
        %v641 = vmul.f32 %v484, %v640
        %v642 = vsub.f32 1.0, %v641
        %v643 = vmul.f32 %v640, %v642
        %v644 = vadd.f32 %v640, %v643
        %vm645 = vweird.f32 %v484
        %vm646 = vweird.f32 %v640
        %vm647 = vmor %vm645, %vm646
        %v648 = vsel %vm647, %v640, %v644
        %v649 = vand.u32 2147483647, %v484
        %vm650 = vcmp.eq.f32.partialorder %v649, 8.507059e+37
        %v651 = vand.u32 %v484, 2147483648
        %v652 = vor.u32 1.1754944e-38, %v651
        %v653 = vsel %vm650, %v652, %v648
        %v654 = vmul.f32 1.0, %v653
        %v655 = vrcp.pop %v485
        %v656 = vmul.f32 %v485, %v655
        %v657 = vsub.f32 1.0, %v656
        %v658 = vmul.f32 %v655, %v657
        %v659 = vadd.f32 %v655, %v658
        %vm660 = vweird.f32 %v485
        %vm661 = vweird.f32 %v655
        %vm662 = vmor %vm660, %vm661
        %v663 = vsel %vm662, %v655, %v659
        %v664 = vand.u32 2147483647, %v485
        %vm665 = vcmp.eq.f32.partialorder %v664, 8.507059e+37
        %v666 = vand.u32 %v485, 2147483648
        %v667 = vor.u32 1.1754944e-38, %v666
        %v668 = vsel %vm665, %v667, %v663
        %v669 = vmul.f32 1.0, %v668
        %v670 = vrcp.pop %v486
        %v671 = vmul.f32 %v486, %v670
        %v672 = vsub.f32 1.0, %v671
        %v673 = vmul.f32 %v670, %v672
        %v674 = vadd.f32 %v670, %v673
        %vm675 = vweird.f32 %v486
        %vm676 = vweird.f32 %v670
        %vm677 = vmor %vm675, %vm676
        %v678 = vsel %vm677, %v670, %v674
        %v679 = vand.u32 2147483647, %v486
        %vm680 = vcmp.eq.f32.partialorder %v679, 8.507059e+37
        %v681 = vand.u32 %v486, 2147483648
        %v682 = vor.u32 1.1754944e-38, %v681
        %v683 = vsel %vm680, %v682, %v678
        %v684 = vmul.f32 1.0, %v683
        %v685 = vrcp.pop %v487
        %v686 = vmul.f32 %v487, %v685
        %v687 = vsub.f32 1.0, %v686
        %v688 = vmul.f32 %v685, %v687
        %v689 = vadd.f32 %v685, %v688
        %vm690 = vweird.f32 %v487
        %vm691 = vweird.f32 %v685
        %vm692 = vmor %vm690, %vm691
        %v693 = vsel %vm692, %v685, %v689
        %v694 = vand.u32 2147483647, %v487
        %vm695 = vcmp.eq.f32.partialorder %v694, 8.507059e+37
        %v696 = vand.u32 %v487, 2147483648
        %v697 = vor.u32 1.1754944e-38, %v696
        %v698 = vsel %vm695, %v697, %v693
        %v699 = vmul.f32 1.0, %v698
        %v700 = vrcp.pop %v488
        %v701 = vmul.f32 %v488, %v700
        %v702 = vsub.f32 1.0, %v701
        %v703 = vmul.f32 %v700, %v702
        %v704 = vadd.f32 %v700, %v703
        %vm705 = vweird.f32 %v488
        %vm706 = vweird.f32 %v700
        %vm707 = vmor %vm705, %vm706
        %v708 = vsel %vm707, %v700, %v704
        %v709 = vand.u32 2147483647, %v488
        %vm710 = vcmp.eq.f32.partialorder %v709, 8.507059e+37
        %v711 = vand.u32 %v488, 2147483648
        %v712 = vor.u32 1.1754944e-38, %v711
        %v713 = vsel %vm710, %v712, %v708
        %v714 = vmul.f32 1.0, %v713
        %v715 = vrcp.pop %v489
        %v716 = vmul.f32 %v489, %v715
        %v717 = vsub.f32 1.0, %v716
        %v718 = vmul.f32 %v715, %v717
        %v719 = vadd.f32 %v715, %v718
        %vm720 = vweird.f32 %v489
        %vm721 = vweird.f32 %v715
        %vm722 = vmor %vm720, %vm721
        %v723 = vsel %vm722, %v715, %v719
        %v724 = vand.u32 2147483647, %v489
        %vm725 = vcmp.eq.f32.partialorder %v724, 8.507059e+37
        %v726 = vand.u32 %v489, 2147483648
        %v727 = vor.u32 1.1754944e-38, %v726
        %v728 = vsel %vm725, %v727, %v723
        %v729 = vmul.f32 1.0, %v728
        %v730 = vmul.f32 %v314, %v504
        %v731 = vmul.f32 %v317, %v519
        %v732 = vmul.f32 %v320, %v534
        %v733 = vmul.f32 %v323, %v549
        %v734 = vmul.f32 %v326, %v564
        %v735 = vmul.f32 %v329, %v579
        %v736 = vmul.f32 %v332, %v594
        %v737 = vmul.f32 %v335, %v609
        %v738 = vmul.f32 %v338, %v624
        %v739 = vmul.f32 %v341, %v639
        %v740 = vmul.f32 %v344, %v654
        %v741 = vmul.f32 %v347, %v669
        %v742 = vmul.f32 %v350, %v684
        %v743 = vmul.f32 %v353, %v699
        %v744 = vmul.f32 %v356, %v714
        %v745 = vmul.f32 %v359, %v729
        %s746 = smul.u32 %s26, 8
        %v747 = vstv %s746
        %v748 = vadd.s32 %v747, 1
        %v749 = vadd.s32 %v747, 2
        %v750 = vadd.s32 %v747, 3
        %v751 = vadd.s32 %v747, 4
        %v752 = vadd.s32 %v747, 5
        %v753 = vadd.s32 %v747, 6
        %v754 = vadd.s32 %v747, 7
        %v755 = vlaneseq
        %v756 = vshrl.u32 %v755, 7
        %v757 = vadd.s32 %v756, 8
        %v758 = vadd.s32 %v748, 3
        %v759 = vadd.s32 %v749, 3
        %v760 = vadd.s32 %v750, 3
        %v761 = vadd.s32 %v751, 3
        %v762 = vadd.s32 %v752, 3
        %v763 = vadd.s32 %v753, 3
        %v764 = vadd.s32 %v754, 3
        %vm765 = vcmp.lt.s32.totalorder %v756, %v750
        %vm766 = vcmp.lt.s32.totalorder %v757, %v750
        %vm767 = vcmp.lt.s32.totalorder %v756, %v758
        %vm768 = vcmp.lt.s32.totalorder %v757, %v758
        %vm769 = vcmp.lt.s32.totalorder %v756, %v759
        %vm770 = vcmp.lt.s32.totalorder %v757, %v759
        %vm771 = vcmp.lt.s32.totalorder %v756, %v760
        %vm772 = vcmp.lt.s32.totalorder %v757, %v760
        %vm773 = vcmp.lt.s32.totalorder %v756, %v761
        %vm774 = vcmp.lt.s32.totalorder %v757, %v761
        %vm775 = vcmp.lt.s32.totalorder %v756, %v762
        %vm776 = vcmp.lt.s32.totalorder %v757, %v762
        %vm777 = vcmp.lt.s32.totalorder %v756, %v763
        %vm778 = vcmp.lt.s32.totalorder %v757, %v763
        %vm779 = vcmp.lt.s32.totalorder %v756, %v764
        %vm780 = vcmp.lt.s32.totalorder %v757, %v764
        %v781 = vsel %vm765, 0.0, -inf
        %v782 = vsel %vm766, 0.0, -inf
        %v783 = vsel %vm767, 0.0, -inf
        %v784 = vsel %vm768, 0.0, -inf
        %v785 = vsel %vm769, 0.0, -inf
        %v786 = vsel %vm770, 0.0, -inf
        %v787 = vsel %vm771, 0.0, -inf
        %v788 = vsel %vm772, 0.0, -inf
        %v789 = vsel %vm773, 0.0, -inf
        %v790 = vsel %vm774, 0.0, -inf
        %v791 = vsel %vm775, 0.0, -inf
        %v792 = vsel %vm776, 0.0, -inf
        %v793 = vsel %vm777, 0.0, -inf
        %v794 = vsel %vm778, 0.0, -inf
        %v795 = vsel %vm779, 0.0, -inf
        %v796 = vsel %vm780, 0.0, -inf
        %v797 = vadd.f32 %v730, %v781
        %v798 = vadd.f32 %v731, %v782
        %v799 = vadd.f32 %v732, %v783
        %v800 = vadd.f32 %v733, %v784
        %v801 = vadd.f32 %v734, %v785
        %v802 = vadd.f32 %v735, %v786
        %v803 = vadd.f32 %v736, %v787
        %v804 = vadd.f32 %v737, %v788
        %v805 = vadd.f32 %v738, %v789
        %v806 = vadd.f32 %v739, %v790
        %v807 = vadd.f32 %v740, %v791
        %v808 = vadd.f32 %v741, %v792
        %v809 = vadd.f32 %v742, %v793
        %v810 = vadd.f32 %v743, %v794
        %v811 = vadd.f32 %v744, %v795
        %v812 = vadd.f32 %v745, %v796
        %v813 = vmax.f32 %v797, %v798
        %v814 = vrot.slane %v813, 4
        %v815 = vmax.f32 %v813, %v814
        %v816 = vrot.slane %v815, 2
        %v817 = vmax.f32 %v815, %v816
        %v818 = vrot.slane %v817, 1
        %v819 = vmax.f32 %v817, %v818
        %v820 = vmax.f32 %v799, %v800
        %v821 = vrot.slane %v820, 4
        %v822 = vmax.f32 %v820, %v821
        %v823 = vrot.slane %v822, 2
        %v824 = vmax.f32 %v822, %v823
        %v825 = vrot.slane %v824, 1
        %v826 = vmax.f32 %v824, %v825
        %v827 = vmax.f32 %v801, %v802
        %v828 = vrot.slane %v827, 4
        %v829 = vmax.f32 %v827, %v828
        %v830 = vrot.slane %v829, 2
        %v831 = vmax.f32 %v829, %v830
        %v832 = vrot.slane %v831, 1
        %v833 = vmax.f32 %v831, %v832
        %v834 = vmax.f32 %v803, %v804
        %v835 = vrot.slane %v834, 4
        %v836 = vmax.f32 %v834, %v835
        %v837 = vrot.slane %v836, 2
        %v838 = vmax.f32 %v836, %v837
        %v839 = vrot.slane %v838, 1
        %v840 = vmax.f32 %v838, %v839
        %v841 = vmax.f32 %v805, %v806
        %v842 = vrot.slane %v841, 4
        %v843 = vmax.f32 %v841, %v842
        %v844 = vrot.slane %v843, 2
        %v845 = vmax.f32 %v843, %v844
        %v846 = vrot.slane %v845, 1
        %v847 = vmax.f32 %v845, %v846
        %v848 = vmax.f32 %v807, %v808
        %v849 = vrot.slane %v848, 4
        %v850 = vmax.f32 %v848, %v849
        %v851 = vrot.slane %v850, 2
        %v852 = vmax.f32 %v850, %v851
        %v853 = vrot.slane %v852, 1
        %v854 = vmax.f32 %v852, %v853
        %v855 = vmax.f32 %v809, %v810
        %v856 = vrot.slane %v855, 4
        %v857 = vmax.f32 %v855, %v856
        %v858 = vrot.slane %v857, 2
        %v859 = vmax.f32 %v857, %v858
        %v860 = vrot.slane %v859, 1
        %v861 = vmax.f32 %v859, %v860
        %v862 = vmax.f32 %v811, %v812
        %v863 = vrot.slane %v862, 4
        %v864 = vmax.f32 %v862, %v863
        %v865 = vrot.slane %v864, 2
        %v866 = vmax.f32 %v864, %v865
        %v867 = vrot.slane %v866, 1
        %v868 = vmax.f32 %v866, %v867
        %vm877 = vcmask 1041409
        %v878 = vsel %vm877, %v826, %v819
        %vm879 = vcmask 1042434
        %v880 = vsel %vm879, %v833, %v878
        %vm881 = vcmask 1043459
        %v882 = vsel %vm881, %v840, %v880
        %vm883 = vcmask 1044484
        %v884 = vsel %vm883, %v847, %v882
        %vm885 = vcmask 1045509
        %v886 = vsel %vm885, %v854, %v884
        %vm887 = vcmask 1046534
        %v888 = vsel %vm887, %v861, %v886
        %vm889 = vcmask 1047559
        %v890 = vsel %vm889, %v868, %v888
        %892 = vst [vmem:[%s240] sm:$0xff] %v890
        %s893 = sand.u32 %s113, 1
        %s894 = scalar_lea.sflag [#allocation4], %s893
        %s895 = sand.u32 %s113, 1
        %s896 = smul.addr %s895, 8
        %s897 = scalar_lea.vmem [#allocation8], %s896
        // Predicated region
        $region45: #{tpu_custom_call.1} parent=31 // pred_check
          %p898 = pneg %p123
        $region46: #{tpu_custom_call.1} parent=31 // pred_check_branch
          %900 = sbr.rel (%p898) target = $region48
        $region47: #{tpu_custom_call.1} parent=31 // pred_region
          %902 = vsyncadd %s894, 0
          %s903 = sadd.s32 %s26, %s25
          %s904 = smul.addr %s903, 8
          %s905 = scalar_lea.hbm %s3, %s904
          %s907 = sshll.u32 %s897, 4
          %s908 = int_to_ptr.vmem [resolvable:$true] %s907
          %s909 = sshll.u32 %s905, 4
          %s910 = int_to_ptr.hbm [resolvable:$true] %s909
          %912 = dma.vmem_to_hbm [thread:$0]  %s908, 128, %s910, %s894
        $region48: #{tpu_custom_call.1} parent=31 // pred_fallthru
          _
      $region32: #{tpu_custom_call.1} parent=5 // pred_fallthru
        _
      %p913 = scmp.le.s32.totalorder 2, %s16
      // Predicated region
      $region49: #{tpu_custom_call.1} parent=5 // pred_check
        %p914 = pneg %p913
      $region50: #{tpu_custom_call.1} parent=5 // pred_check_branch
        %916 = sbr.rel (%p914) target = $region52
      $region51: #{tpu_custom_call.1} parent=5 // pred_region
        %s917 = ssub.s32 %s16, 2
        // Predicated region
        $region53: #{tpu_custom_call.1} parent=51 // pred_check
          %p918 = pneg %p129
        $region54: #{tpu_custom_call.1} parent=51 // pred_check_branch
          %920 = sbr.rel (%p918) target = $region56
        $region55: #{tpu_custom_call.1} parent=51 // pred_region
          %s921 = sand.u32 %s114, 1
          %s922 = scalar_lea.sflag [#allocation4], %s921
          %s923 = sand.u32 %s114, 1
          %s924 = smul.addr %s923, 8
          %s925 = scalar_lea.vmem [#allocation8], %s924
          %927 = dma.done %s922, 128
        $region56: #{tpu_custom_call.1} parent=51 // pred_fallthru
          _
      $region52: #{tpu_custom_call.1} parent=5 // pred_fallthru
        _
    $region6: #{tpu_custom_call.1} parent=1 // loop_footer
      %s20 = sadd.s32 1, %s16
    $region7: #{tpu_custom_call.1} parent=1 // loop_footer_branch
      %15 = sbr.rel target = $region3
    $region8: #{tpu_custom_call.1} parent=1 // loop_exit
      _
    %928 = vsyncpa [#allocation3], 1
    %s929 = scalar_lea.sflag [#allocation3], 1
    %930 = vsyncpa %s929, 1
    %931 = vsyncpa [#allocation6], 1
    %932 = vsyncpa [#allocation4], 1
    %s933 = scalar_lea.sflag [#allocation4], 1
    %934 = vsyncpa %s933, 1

</llo_original>
